<compile_context>
chip_gen: v5e
topology: v5e:2x2
jax: 0.10.0
libtpu: 0.0.40
codegen_flags: <defaults>
</compile_context>

<pallas_src>
import jax
import jax.numpy as jnp
from jax.experimental import pallas as pl
from jax.experimental.pallas import tpu as pltpu


def _round_up(x, m):
    return ((x + m - 1) // m) * m


def _affine_rows_kernel(x_ref, w_ref, b_ref, o_ref):
    # x_ref: (TM, TL) tile of the flattened (N*C, H*W) slab
    # w_ref, b_ref: (TM, 1) per-row scale / bias, broadcast along the lane axis
    o_ref[...] = x_ref[...] * w_ref[...] + b_ref[...]


def random_exclusive_list_apply(x_nchw, weights, biases, probabilities, key):
    """JAX/Pallas equivalent of RandomExclusiveListApply.forward.

    weights, biases: (K, C) stacked parameters of the K choice modules.
    probabilities:   (K,) selection probabilities (already normalized).
    """
    K = weights.shape[0]
    if K == 0:  # len(choice_modules) == 0 -> identity
        return x_nchw

    # torch.multinomial(self.probabilities, num_samples=1) equivalent (glue).
    idx = jax.random.choice(key, K, p=probabilities)

    N, C, H, W = x_nchw.shape
    rows, L = N * C, H * W
    dtype = x_nchw.dtype

    # Select the chosen module's params outside the kernel and expand to one
    # (scale, bias) per row of the flattened slab.
    # NOTE: params are cast to x.dtype (quantizes if x is bf16 — intentional).
    w_sel = jnp.take(weights, idx, axis=0).astype(dtype)  # (C,)
    b_sel = jnp.take(biases, idx, axis=0).astype(dtype)   # (C,)
    w_rows = jnp.tile(w_sel, N).reshape(rows, 1)           # (N*C, 1)
    b_rows = jnp.tile(b_sel, N).reshape(rows, 1)           # (N*C, 1)

    # Lane-dense 2D slab: rows on the sublane axis, spatial on the lane axis.
    x2d = x_nchw.reshape(rows, L)

    # Tile sizing: <= (256, 2048) f32 = 2 MiB per buffer.  Double-buffered
    # input + output tiles (~8 MiB) fit all scoped-VMEM defaults.
    TL = min(_round_up(L, 128), 2048)
    TM = min(_round_up(rows, 8), 256)
    L_pad = _round_up(L, TL)
    R_pad = _round_up(rows, TM)

    if (R_pad, L_pad) != (rows, L):
        x2d = jnp.pad(x2d, ((0, R_pad - rows), (0, L_pad - L)))
        w_rows = jnp.pad(w_rows, ((0, R_pad - rows), (0, 0)))
        b_rows = jnp.pad(b_rows, ((0, R_pad - rows), (0, 0)))

    grid = (R_pad // TM, L_pad // TL)

    out = pl.pallas_call(
        _affine_rows_kernel,
        out_shape=jax.ShapeDtypeStruct((R_pad, L_pad), dtype),
        grid_spec=pltpu.PrefetchScalarGridSpec(
            num_scalar_prefetch=0,
            grid=grid,
            in_specs=[
                pl.BlockSpec((TM, TL), lambda i, j: (i, j)),
                pl.BlockSpec((TM, 1), lambda i, j: (i, 0)),
                pl.BlockSpec((TM, 1), lambda i, j: (i, 0)),
            ],
            out_specs=pl.BlockSpec((TM, TL), lambda i, j: (i, j)),
        ),
        compiler_params=pltpu.CompilerParams(
            dimension_semantics=("parallel", "parallel"),
        ),
    )(x2d, w_rows, b_rows)

    if (R_pad, L_pad) != (rows, L):
        out = out[:rows, :L]
    return out.reshape(N, C, H, W)


if __name__ == "__main__":
    # Small shapes consistent with an image-transform module: NCHW input.
    N, C, H, W = 2, 4, 16, 16
    K = 3  # number of choice modules

    root = jax.random.PRNGKey(0)
    k_x, k_choice = jax.random.split(root)

    x = jax.random.normal(k_x, (N, C, H, W), dtype=jnp.float32)

    # Deterministic synthetic parameters for the K per-channel affine modules.
    weights = (jnp.arange(K * C, dtype=jnp.float32).reshape(K, C) * 0.1 + 0.5)
    biases = (jnp.arange(K * C, dtype=jnp.float32).reshape(K, C) * 0.01 - 0.05)

    # Default __init__ path (probabilities=None): uniform over modules.
    probabilities = jnp.ones((K,), dtype=jnp.float32) / K

    out = random_exclusive_list_apply(x, weights, biases, probabilities, k_choice)
    out = jax.block_until_ready(out)

    # Pure-JAX reference with the same sampled index.
    idx_ref = int(jax.random.choice(k_choice, K, p=probabilities))
    ref = x * weights[idx_ref][None, :, None, None] + biases[idx_ref][None, :, None, None]
    assert out.shape == x.shape and out.dtype == x.dtype
    assert jnp.allclose(out, ref, atol=1e-6, rtol=1e-6)

    print("KERNEL_OK")
</pallas_src>

<mosaic_0001>
module attributes {stable_mosaic.version = 11 : i64} {
  func.func @_affine_rows_kernel(%arg0: i32, %arg1: i32, %arg2: memref<8x256xf32, #tpu.memory_space<vmem>>, %arg3: memref<8x1xf32, #tpu.memory_space<vmem>>, %arg4: memref<8x1xf32, #tpu.memory_space<vmem>>, %arg5: memref<8x256xf32, #tpu.memory_space<vmem>>) attributes {dimension_semantics = [#tpu.dimension_semantics<parallel>, #tpu.dimension_semantics<parallel>], iteration_bounds = array<i64: 1, 1>, scalar_prefetch = 0 : i64, scratch_operands = 0 : i64, tpu.core_type = #tpu.core_type<tc>, window_params = [{transform_indices = @transform_0, window_bounds = array<i64: 8, 256>}, {transform_indices = @transform_1, window_bounds = array<i64: 8, 1>}, {transform_indices = @transform_2, window_bounds = array<i64: 8, 1>}, {transform_indices = @transform_3, window_bounds = array<i64: 8, 256>}]} {
    %c0 = arith.constant 0 : index
    %c0_0 = arith.constant 0 : index
    %0 = vector.load %arg2[%c0, %c0_0] : memref<8x256xf32, #tpu.memory_space<vmem>>, vector<8x256xf32>
    %c0_1 = arith.constant 0 : index
    %c0_2 = arith.constant 0 : index
    %1 = vector.load %arg3[%c0_1, %c0_2] : memref<8x1xf32, #tpu.memory_space<vmem>>, vector<8x1xf32>
    %2 = vector.broadcast %1 : vector<8x1xf32> to vector<8x256xf32>
    %3 = arith.mulf %0, %2 : vector<8x256xf32>
    %c0_3 = arith.constant 0 : index
    %c0_4 = arith.constant 0 : index
    %4 = vector.load %arg4[%c0_3, %c0_4] : memref<8x1xf32, #tpu.memory_space<vmem>>, vector<8x1xf32>
    %5 = vector.broadcast %4 : vector<8x1xf32> to vector<8x256xf32>
    %6 = arith.addf %3, %5 : vector<8x256xf32>
    %c0_5 = arith.constant 0 : index
    %c0_6 = arith.constant 0 : index
    %7 = vector.load %arg5[%c0_5, %c0_6] : memref<8x256xf32, #tpu.memory_space<vmem>>, vector<8x256xf32>
    tpu.vector_store %arg5[%c0_5, %c0_6], %6 {strides = array<i32>} : memref<8x256xf32, #tpu.memory_space<vmem>>, vector<8x256xf32>,
    return
  }
  func.func @transform_0(%arg0: i32, %arg1: i32) -> (i32, i32) {
    %c0_i32 = arith.constant 0 : i32
    return %arg0, %arg1 : i32, i32
  }
  func.func @transform_1(%arg0: i32, %arg1: i32) -> (i32, i32) {
    %c0_i32 = arith.constant 0 : i32
    %c0_i32_0 = arith.constant 0 : i32
    return %arg0, %c0_i32 : i32, i32
  }
  func.func @transform_2(%arg0: i32, %arg1: i32) -> (i32, i32) {
    %c0_i32 = arith.constant 0 : i32
    %c0_i32_0 = arith.constant 0 : i32
    return %arg0, %c0_i32 : i32, i32
  }
  func.func @transform_3(%arg0: i32, %arg1: i32) -> (i32, i32) {
    %c0_i32 = arith.constant 0 : i32
    return %arg0, %arg1 : i32, i32
  }
}

</mosaic_0001>

<llo_original>
// kernel: tpu_custom_call.1
$region0: #{tpu_custom_call.1}
  #allocation0 [shape = 'u32[]', space=smem, size = 0x4, offset = 0x4, fixed_abs, tag = 'smem constant byte address 0x4 - core index']
  #allocation1 [shape = 'u32[72,128]{1,0:T(1,128)}', space=vmem, size = 0x9000, scoped, tag = 'internal scratch']
  %s0 = inlined_call_operand.vmem [shape: f32[8,256], index: 0, kind: input, shape index: {}]
  %s1 = inlined_call_operand.vmem [shape: f32[8,1], index: 1, kind: input, shape index: {}]
  %s2 = inlined_call_operand.vmem [shape: f32[8,1], index: 2, kind: input, shape index: {}]
  %s3 = inlined_call_operand.hbm [shape: f32[8,256], index: 3, kind: output, shape index: {}]
  %s4 = sld [smem:[#allocation0]]
  $region22: #{tpu_custom_call.1} parent=0
    _
  %s6 = ssub.s32 1, %s4
  %s7 = scalar_select 0, %s6, %s4
  $region1: #{tpu_custom_call.1} parent=0
    #allocation2 [shape = 'u8[8192]{0}', space=vmem, size = 0x2000, scoped, tag = 'output window, operand 0, single buffered']
    #allocation3 [shape = 's32[1]{0}', space=sflag, size = 0x4, scoped, tag = 'scoped memory for tpu_custom_call.1']
    %8 = vsyncpa [#allocation3], 0
    // Predicated region
    $region2: #{tpu_custom_call.1} parent=1 // pred_check
      _
    $region3: #{tpu_custom_call.1} parent=1 // pred_check_branch
      %10 = sbr.rel (0) target = $region5
    $region4: #{tpu_custom_call.1} parent=1 // pred_region
      _
    $region5: #{tpu_custom_call.1} parent=1 // pred_fallthru
      _
    // Predicated region
    $region6: #{tpu_custom_call.1} parent=1 // pred_check
      _
    $region7: #{tpu_custom_call.1} parent=1 // pred_check_branch
      %12 = sbr.rel (0) target = $region9
    $region8: #{tpu_custom_call.1} parent=1 // pred_region
      _
    $region9: #{tpu_custom_call.1} parent=1 // pred_fallthru
      _
    // Predicated region
    $region10: #{tpu_custom_call.1} parent=1 // pred_check
      _
    $region11: #{tpu_custom_call.1} parent=1 // pred_check_branch
      %14 = sbr.rel (0) target = $region13
    $region12: #{tpu_custom_call.1} parent=1 // pred_region
      _
    $region13: #{tpu_custom_call.1} parent=1 // pred_fallthru
      _
    %v15 = vld [vmem:[%s0] sm:$0xff]
    %v16 = vld [vmem:[%s0 + $0x8] sm:$0xff]
    %v17 = vld [vmem:[%s1] sm:$0xff]
    %19 = vset.pattern.permute.xlu0 0
    %20 = vperm.xlu0 %19, %v17
    %v21 = vpop.permute.xlu0 %20
    %v23 = vmul.f32 %v15, %v21
    %v24 = vmul.f32 %v16, %v21
    %v25 = vld [vmem:[%s2] sm:$0xff]
    %27 = vset.pattern.permute.xlu0 0
    %28 = vperm.xlu0 %27, %v25
    %v29 = vpop.permute.xlu0 %28
    %v31 = vadd.f32 %v23, %v29
    %v32 = vadd.f32 %v24, %v29
    %33 = vst [vmem:[#allocation2] sm:$0xff] %v31
    %34 = vst [vmem:[#allocation2 + $0x8] sm:$0xff] %v32
    // Predicated region
    $region14: #{tpu_custom_call.1} parent=1 // pred_check
      _
    $region15: #{tpu_custom_call.1} parent=1 // pred_check_branch
      %36 = sbr.rel (0) target = $region17
    $region16: #{tpu_custom_call.1} parent=1 // pred_region
      %38 = vsyncadd [#allocation3], 0
      %s40 = sshll.u32 [#allocation2], 4
      %s41 = int_to_ptr.vmem [resolvable:$true] %s40
      %s42 = sshll.u32 %s3, 4
      %s43 = int_to_ptr.hbm [resolvable:$true] %s42
      %45 = dma.vmem_to_hbm [thread:$0]  %s41, 256, %s43, [#allocation3]
    $region17: #{tpu_custom_call.1} parent=1 // pred_fallthru
      _
    // Predicated region
    $region18: #{tpu_custom_call.1} parent=1 // pred_check
      _
    $region19: #{tpu_custom_call.1} parent=1 // pred_check_branch
      %47 = sbr.rel (0) target = $region21
    $region20: #{tpu_custom_call.1} parent=1 // pred_region
      %49 = dma.done [#allocation3], 256
    $region21: #{tpu_custom_call.1} parent=1 // pred_fallthru
      _
    %50 = vsyncpa [#allocation3], 1

</llo_original>
